<compile_context>
chip_gen: v7x
topology: tpu7x:2x2x1
jax: 0.10.0
libtpu: 0.0.40
codegen_flags: <defaults>
</compile_context>

<pallas_src>
import functools
import math

import jax
import jax.numpy as jnp
from jax import lax
from jax.experimental import pallas as pl
from jax.experimental.pallas import tpu as pltpu


def _self_attention_kernel(x_ref, w_ref, b_ref, o_ref, *,
                           num_heads, head_dim, batch_block, seq_len):
    """Fused QKV projection + per-head attention for `batch_block` batch elems.

    x_ref : (bb, S, H)   bf16
    w_ref : (H, 3*A)     bf16  (1/sqrt(head_dim) folded into the Q columns)
    b_ref : (1, 3*A)     f32   (1/sqrt(head_dim) folded into the Q part)
    o_ref : (bb, S, A)   f32   with A = num_heads * head_dim
    """
    A = num_heads * head_dim
    bb, S = batch_block, seq_len

    # Single lane-dense bf16 MXU matmul over all bb*S rows (f32 accumulation).
    # Leading-dim merge (bb, S, H) -> (bb*S, H) is layout-free (lane dim kept).
    x = x_ref[...].reshape(bb * S, -1)
    qkv_f32 = jnp.dot(x, w_ref[...], preferred_element_type=jnp.float32)
    # Bias added in f32, then the whole qkv slab is staged once in bf16.
    qkv = (qkv_f32 + b_ref[...]).astype(jnp.bfloat16)            # (bb*S, 3*A)

    for b in range(bb):                        # static unroll over batch block
        r = b * S
        for h in range(num_heads):             # static unroll over heads
            lo = h * head_dim
            q = qkv[r:r + S, 0 * A + lo:0 * A + lo + head_dim]   # (S, D) bf16
            k = qkv[r:r + S, 1 * A + lo:1 * A + lo + head_dim]   # (pre-scaled Q)
            v = qkv[r:r + S, 2 * A + lo:2 * A + lo + head_dim]

            # scores = q @ k^T, contracting last axes (no materialized .T).
            scores = lax.dot_general(
                q, k,
                dimension_numbers=(((1,), (1,)), ((), ())),
                preferred_element_type=jnp.float32)               # (S, S) f32

            # Numerically stable softmax statistics in f32; normalization is
            # deferred until after the PV matmul (S x D instead of S x S work).
            m = jnp.max(scores, axis=-1, keepdims=True)
            p = jnp.exp(scores - m)
            denom = jnp.sum(p, axis=-1, keepdims=True)

            # TODO(synk): nn.Dropout on attention_probs is identity at
            # inference (training-mode dropout not implemented).
            ctx = jnp.dot(p.astype(jnp.bfloat16), v,
                          preferred_element_type=jnp.float32)     # (S, D) f32
            ctx = ctx * pl.reciprocal(denom, approx=True)

            # Per-head direct store into the final (B, S, A) layout — no list
            # accumulation, no concatenate, bounded live ranges.
            o_ref[b, :, lo:lo + head_dim] = ctx.astype(o_ref.dtype)


def self_attention(hidden_states, wq, bq, wk, bk, wv, bv, num_attention_heads):
    """hidden_states: (B, S, H) float32.
    wq/wk/wv: PyTorch-style Linear weights (all_head_size, H); bq/bk/bv: (all_head_size,).
    Returns (B, S, all_head_size) float32 — same semantics as SelfAttention.forward
    (eval mode, no mask).
    """
    B, S, H = hidden_states.shape
    all_head_size = wq.shape[0]
    head_dim = all_head_size // num_attention_heads
    scale = 1.0 / math.sqrt(head_dim)

    # Fused, pre-transposed QKV weights in bf16 with the softmax scale folded
    # into the Q projection (constant prep -> zero in-kernel cost).  Bias stays
    # f32 and is added to the f32 MXU accumulator inside the kernel.
    w_qkv = jnp.concatenate([wq.T * scale, wk.T, wv.T], axis=1).astype(jnp.bfloat16)
    b_qkv = jnp.concatenate([bq * scale, bk, bv], axis=0).astype(jnp.float32)
    b_qkv = b_qkv.reshape(1, 3 * all_head_size)                    # (1, 3*A)
    x_bf16 = hidden_states.astype(jnp.bfloat16)

    # Small problems: the whole batch in one grid step (single projection matmul
    # over B*S rows, fewer per-step overheads).  Large problems: one batch
    # element per step so activation blocks stay small.
    batch_block = B if B * S <= 2048 else 1
    assert B % batch_block == 0
    grid = (B // batch_block,)

    # Derive a scoped-VMEM budget from the actual block sizes (raise above the
    # 32 MiB default when needed; cap at 64 MiB for v7x's physical limit).
    est_bytes = (
        w_qkv.size * 2 + b_qkv.size * 4
        + 2 * batch_block * S * H * 2                       # x blocks (bf16, dbl-buf)
        + 2 * batch_block * S * all_head_size * 4           # out blocks (f32, dbl-buf)
        + batch_block * S * 3 * all_head_size * (4 + 2)     # f32 acc + bf16 qkv slab
        + 2 * S * S * 4)                                    # scores / exp (f32)
    vmem_limit = int(max(32 * 1024 * 1024, min(64 * 1024 * 1024, 2 * est_bytes)))

    # Advisory cost estimate for XLA scheduling around the kernel.
    flops = (2 * B * S * H * 3 * all_head_size
             + 4 * B * num_attention_heads * S * S * head_dim)
    transcendentals = B * num_attention_heads * S * S
    bytes_accessed = (2 * x_bf16.size + 2 * w_qkv.size + 4 * b_qkv.size
                      + 4 * B * S * all_head_size)
    cost = pl.CostEstimate(flops=int(flops),
                           transcendentals=int(transcendentals),
                           bytes_accessed=int(bytes_accessed))

    kernel = pl.pallas_call(
        functools.partial(_self_attention_kernel,
                          num_heads=num_attention_heads, head_dim=head_dim,
                          batch_block=batch_block, seq_len=S),
        out_shape=jax.ShapeDtypeStruct((B, S, all_head_size), jnp.float32),
        grid_spec=pltpu.PrefetchScalarGridSpec(
            num_scalar_prefetch=0,
            grid=grid,
            in_specs=[
                # Activations: one (bb, S, H) bf16 block per grid step.
                pl.BlockSpec((batch_block, S, H), lambda i: (i, 0, 0)),
                # Fused QKV weights/bias: batch-invariant index_map -> fetched
                # once, kept resident in VMEM for all grid steps.
                pl.BlockSpec((H, 3 * all_head_size), lambda i: (0, 0)),
                pl.BlockSpec((1, 3 * all_head_size), lambda i: (0, 0)),
            ],
            out_specs=pl.BlockSpec((batch_block, S, all_head_size),
                                   lambda i: (i, 0, 0)),
        ),
        compiler_params=pltpu.CompilerParams(
            dimension_semantics=("parallel",),
            vmem_limit_bytes=vmem_limit),
        cost_estimate=cost,
    )
    return kernel(x_bf16, w_qkv, b_qkv)


def _reference(hidden_states, wq, bq, wk, bk, wv, bv, num_heads):
    """Pure-JAX f32 re-implementation of the PyTorch module (eval mode)."""
    B, S, H = hidden_states.shape
    all_head = wq.shape[0]
    d = all_head // num_heads

    def proj(w, b):
        y = hidden_states @ w.T + b                               # (B, S, all_head)
        return jnp.transpose(y.reshape(B, S, num_heads, d), (0, 2, 1, 3))

    q, k, v = proj(wq, bq), proj(wk, bk), proj(wv, bv)
    scores = jnp.einsum("bhqd,bhkd->bhqk", q, k) / math.sqrt(d)
    probs = jax.nn.softmax(scores, axis=-1)
    ctx = jnp.einsum("bhqk,bhkd->bhqd", probs, v)
    return jnp.transpose(ctx, (0, 2, 1, 3)).reshape(B, S, all_head)


if __name__ == "__main__":
    # Small shapes consistent with the module's forward:
    # batch=2, seq=8, hidden_size=32, num_heads=4, output_size=32.
    B, S, H = 2, 8, 32
    num_heads = 4
    output_size = 32

    key = jax.random.PRNGKey(0)
    kx, kq, kbq, kk, kbk, kv, kbv = jax.random.split(key, 7)

    hidden_states = jax.random.normal(kx, (B, S, H), dtype=jnp.float32)
    # PyTorch Linear layout: weight (out, in), bias (out,).
    wq = 0.1 * jax.random.normal(kq, (output_size, H), dtype=jnp.float32)
    bq = 0.1 * jax.random.normal(kbq, (output_size,), dtype=jnp.float32)
    wk = 0.1 * jax.random.normal(kk, (output_size, H), dtype=jnp.float32)
    bk = 0.1 * jax.random.normal(kbk, (output_size,), dtype=jnp.float32)
    wv = 0.1 * jax.random.normal(kv, (output_size, H), dtype=jnp.float32)
    bv = 0.1 * jax.random.normal(kbv, (output_size,), dtype=jnp.float32)

    out = self_attention(hidden_states, wq, bq, wk, bk, wv, bv, num_heads)
    out = jax.block_until_ready(out)

    ref = _reference(hidden_states, wq, bq, wk, bk, wv, bv, num_heads)
    assert out.shape == (B, S, output_size)
    # Tolerance accounts for bf16 inputs/weights on the MXU + approx reciprocal
    # vs the f32 reference.
    assert jnp.allclose(out, ref, atol=3e-2, rtol=3e-2), (
        float(jnp.max(jnp.abs(out - ref))))

    print("KERNEL_OK")
</pallas_src>

<mosaic_0001>
module attributes {stable_mosaic.version = 11 : i64} {
  func.func @_self_attention_kernel(%arg0: i32, %arg1: memref<2x8x32xbf16, #tpu.memory_space<vmem>>, %arg2: memref<32x96xbf16, #tpu.memory_space<vmem>>, %arg3: memref<1x96xf32, #tpu.memory_space<vmem>>, %arg4: memref<2x8x32xf32, #tpu.memory_space<vmem>>) attributes {dimension_semantics = [#tpu.dimension_semantics<parallel>], iteration_bounds = array<i64: 1>, scalar_prefetch = 0 : i64, scratch_operands = 0 : i64, tpu.core_type = #tpu.core_type<tc>, window_params = [{transform_indices = @transform_0, window_bounds = array<i64: 2, 8, 32>}, {pipeline_mode = #tpu.pipeline_mode<synchronous>, transform_indices = @transform_1, window_bounds = array<i64: 32, 96>}, {pipeline_mode = #tpu.pipeline_mode<synchronous>, transform_indices = @transform_2, window_bounds = array<i64: 1, 96>}, {transform_indices = @transform_3, window_bounds = array<i64: 2, 8, 32>}]} {
    %c0 = arith.constant 0 : index
    %c0_0 = arith.constant 0 : index
    %c0_1 = arith.constant 0 : index
    %0 = vector.load %arg1[%c0, %c0_0, %c0_1] : memref<2x8x32xbf16, #tpu.memory_space<vmem>>, vector<2x8x32xbf16>
    %1 = vector.shape_cast %0 : vector<2x8x32xbf16> to vector<16x32xbf16>
    %c0_2 = arith.constant 0 : index
    %c0_3 = arith.constant 0 : index
    %2 = vector.load %arg2[%c0_2, %c0_3] : memref<32x96xbf16, #tpu.memory_space<vmem>>, vector<32x96xbf16>
    %cst = arith.constant dense<0.000000e+00> : vector<16x96xf32>
    %3 = tpu.matmul %1, %2, %cst {dimension_numbers = #tpu.dot_dimension_numbers<[1], [0], [0], [1], [0, 0, 1, 1], [], []>} : vector<16x32xbf16>, vector<32x96xbf16>, vector<16x96xf32> -> vector<16x96xf32>
    %c0_4 = arith.constant 0 : index
    %c0_5 = arith.constant 0 : index
    %4 = vector.load %arg3[%c0_4, %c0_5] : memref<1x96xf32, #tpu.memory_space<vmem>>, vector<1x96xf32>
    %5 = vector.broadcast %4 : vector<1x96xf32> to vector<16x96xf32>
    %6 = arith.addf %3, %5 : vector<16x96xf32>
    %7 = arith.truncf %6 : vector<16x96xf32> to vector<16x96xbf16>
    %8 = vector.extract_strided_slice %7 {offsets = [0, 0], sizes = [8, 8], strides = [1, 1]} : vector<16x96xbf16> to vector<8x8xbf16>
    %9 = vector.extract_strided_slice %7 {offsets = [0, 32], sizes = [8, 8], strides = [1, 1]} : vector<16x96xbf16> to vector<8x8xbf16>
    %10 = vector.extract_strided_slice %7 {offsets = [0, 64], sizes = [8, 8], strides = [1, 1]} : vector<16x96xbf16> to vector<8x8xbf16>
    %cst_6 = arith.constant dense<0.000000e+00> : vector<8x8xf32>
    %11 = tpu.matmul %8, %9, %cst_6 {dimension_numbers = #tpu.dot_dimension_numbers<[1], [1], [0], [0], [0, 0, 1, 0], [], []>} : vector<8x8xbf16>, vector<8x8xbf16>, vector<8x8xf32> -> vector<8x8xf32>
    %cst_7 = arith.constant dense<0xFF800000> : vector<8xf32>
    %12 = vector.multi_reduction <maximumf>, %11, %cst_7 [1] : vector<8x8xf32> to vector<8xf32>
    %13 = vector.shape_cast %12 : vector<8xf32> to vector<8x1xf32>
    %14 = vector.broadcast %13 : vector<8x1xf32> to vector<8x8xf32>
    %15 = arith.subf %11, %14 : vector<8x8xf32>
    %16 = math.exp %15 : vector<8x8xf32>
    %cst_8 = arith.constant dense<0.000000e+00> : vector<8xf32>
    %17 = vector.multi_reduction <add>, %16, %cst_8 [1] : vector<8x8xf32> to vector<8xf32>
    %18 = vector.shape_cast %17 : vector<8xf32> to vector<8x1xf32>
    %19 = arith.truncf %16 : vector<8x8xf32> to vector<8x8xbf16>
    %cst_9 = arith.constant dense<0.000000e+00> : vector<8x8xf32>
    %20 = tpu.matmul %19, %10, %cst_9 {dimension_numbers = #tpu.dot_dimension_numbers<[1], [0], [0], [1], [0, 0, 1, 1], [], []>} : vector<8x8xbf16>, vector<8x8xbf16>, vector<8x8xf32> -> vector<8x8xf32>
    %21 = tpu.reciprocal %18 {approx = true} : vector<8x1xf32> -> vector<8x1xf32>
    %22 = vector.broadcast %21 : vector<8x1xf32> to vector<8x8xf32>
    %23 = arith.mulf %20, %22 : vector<8x8xf32>
    %c0_10 = arith.constant 0 : index
    %c0_11 = arith.constant 0 : index
    %c0_12 = arith.constant 0 : index
    %24 = vector.load %arg4[%c0_10, %c0_11, %c0_12] : memref<2x8x32xf32, #tpu.memory_space<vmem>>, vector<1x8x8xf32>
    %25 = vector.shape_cast %24 : vector<1x8x8xf32> to vector<8x8xf32>
    %26 = vector.shape_cast %23 : vector<8x8xf32> to vector<1x8x8xf32>
    tpu.vector_store %arg4[%c0_10, %c0_11, %c0_12], %26 {strides = array<i32>} : memref<2x8x32xf32, #tpu.memory_space<vmem>>, vector<1x8x8xf32>,
    %27 = vector.extract_strided_slice %7 {offsets = [0, 8], sizes = [8, 8], strides = [1, 1]} : vector<16x96xbf16> to vector<8x8xbf16>
    %28 = vector.extract_strided_slice %7 {offsets = [0, 40], sizes = [8, 8], strides = [1, 1]} : vector<16x96xbf16> to vector<8x8xbf16>
    %29 = vector.extract_strided_slice %7 {offsets = [0, 72], sizes = [8, 8], strides = [1, 1]} : vector<16x96xbf16> to vector<8x8xbf16>
    %cst_13 = arith.constant dense<0.000000e+00> : vector<8x8xf32>
    %30 = tpu.matmul %27, %28, %cst_13 {dimension_numbers = #tpu.dot_dimension_numbers<[1], [1], [0], [0], [0, 0, 1, 0], [], []>} : vector<8x8xbf16>, vector<8x8xbf16>, vector<8x8xf32> -> vector<8x8xf32>
    %cst_14 = arith.constant dense<0xFF800000> : vector<8xf32>
    %31 = vector.multi_reduction <maximumf>, %30, %cst_14 [1] : vector<8x8xf32> to vector<8xf32>
    %32 = vector.shape_cast %31 : vector<8xf32> to vector<8x1xf32>
    %33 = vector.broadcast %32 : vector<8x1xf32> to vector<8x8xf32>
    %34 = arith.subf %30, %33 : vector<8x8xf32>
    %35 = math.exp %34 : vector<8x8xf32>
    %cst_15 = arith.constant dense<0.000000e+00> : vector<8xf32>
    %36 = vector.multi_reduction <add>, %35, %cst_15 [1] : vector<8x8xf32> to vector<8xf32>
    %37 = vector.shape_cast %36 : vector<8xf32> to vector<8x1xf32>
    %38 = arith.truncf %35 : vector<8x8xf32> to vector<8x8xbf16>
    %cst_16 = arith.constant dense<0.000000e+00> : vector<8x8xf32>
    %39 = tpu.matmul %38, %29, %cst_16 {dimension_numbers = #tpu.dot_dimension_numbers<[1], [0], [0], [1], [0, 0, 1, 1], [], []>} : vector<8x8xbf16>, vector<8x8xbf16>, vector<8x8xf32> -> vector<8x8xf32>
    %40 = tpu.reciprocal %37 {approx = true} : vector<8x1xf32> -> vector<8x1xf32>
    %41 = vector.broadcast %40 : vector<8x1xf32> to vector<8x8xf32>
    %42 = arith.mulf %39, %41 : vector<8x8xf32>
    %c0_17 = arith.constant 0 : index
    %c0_18 = arith.constant 0 : index
    %c8 = arith.constant 8 : index
    %43 = vector.load %arg4[%c0_17, %c0_18, %c8] : memref<2x8x32xf32, #tpu.memory_space<vmem>>, vector<1x8x8xf32>
    %44 = vector.shape_cast %43 : vector<1x8x8xf32> to vector<8x8xf32>
    %45 = vector.shape_cast %42 : vector<8x8xf32> to vector<1x8x8xf32>
    tpu.vector_store %arg4[%c0_17, %c0_18, %c8], %45 {strides = array<i32>} : memref<2x8x32xf32, #tpu.memory_space<vmem>>, vector<1x8x8xf32>,
    %46 = vector.extract_strided_slice %7 {offsets = [0, 16], sizes = [8, 8], strides = [1, 1]} : vector<16x96xbf16> to vector<8x8xbf16>
    %47 = vector.extract_strided_slice %7 {offsets = [0, 48], sizes = [8, 8], strides = [1, 1]} : vector<16x96xbf16> to vector<8x8xbf16>
    %48 = vector.extract_strided_slice %7 {offsets = [0, 80], sizes = [8, 8], strides = [1, 1]} : vector<16x96xbf16> to vector<8x8xbf16>
    %cst_19 = arith.constant dense<0.000000e+00> : vector<8x8xf32>
    %49 = tpu.matmul %46, %47, %cst_19 {dimension_numbers = #tpu.dot_dimension_numbers<[1], [1], [0], [0], [0, 0, 1, 0], [], []>} : vector<8x8xbf16>, vector<8x8xbf16>, vector<8x8xf32> -> vector<8x8xf32>
    %cst_20 = arith.constant dense<0xFF800000> : vector<8xf32>
    %50 = vector.multi_reduction <maximumf>, %49, %cst_20 [1] : vector<8x8xf32> to vector<8xf32>
    %51 = vector.shape_cast %50 : vector<8xf32> to vector<8x1xf32>
    %52 = vector.broadcast %51 : vector<8x1xf32> to vector<8x8xf32>
    %53 = arith.subf %49, %52 : vector<8x8xf32>
    %54 = math.exp %53 : vector<8x8xf32>
    %cst_21 = arith.constant dense<0.000000e+00> : vector<8xf32>
    %55 = vector.multi_reduction <add>, %54, %cst_21 [1] : vector<8x8xf32> to vector<8xf32>
    %56 = vector.shape_cast %55 : vector<8xf32> to vector<8x1xf32>
    %57 = arith.truncf %54 : vector<8x8xf32> to vector<8x8xbf16>
    %cst_22 = arith.constant dense<0.000000e+00> : vector<8x8xf32>
    %58 = tpu.matmul %57, %48, %cst_22 {dimension_numbers = #tpu.dot_dimension_numbers<[1], [0], [0], [1], [0, 0, 1, 1], [], []>} : vector<8x8xbf16>, vector<8x8xbf16>, vector<8x8xf32> -> vector<8x8xf32>
    %59 = tpu.reciprocal %56 {approx = true} : vector<8x1xf32> -> vector<8x1xf32>
    %60 = vector.broadcast %59 : vector<8x1xf32> to vector<8x8xf32>
    %61 = arith.mulf %58, %60 : vector<8x8xf32>
    %c0_23 = arith.constant 0 : index
    %c0_24 = arith.constant 0 : index
    %c16 = arith.constant 16 : index
    %62 = vector.load %arg4[%c0_23, %c0_24, %c16] : memref<2x8x32xf32, #tpu.memory_space<vmem>>, vector<1x8x8xf32>
    %63 = vector.shape_cast %62 : vector<1x8x8xf32> to vector<8x8xf32>
    %64 = vector.shape_cast %61 : vector<8x8xf32> to vector<1x8x8xf32>
    tpu.vector_store %arg4[%c0_23, %c0_24, %c16], %64 {strides = array<i32>} : memref<2x8x32xf32, #tpu.memory_space<vmem>>, vector<1x8x8xf32>,
    %65 = vector.extract_strided_slice %7 {offsets = [0, 24], sizes = [8, 8], strides = [1, 1]} : vector<16x96xbf16> to vector<8x8xbf16>
    %66 = vector.extract_strided_slice %7 {offsets = [0, 56], sizes = [8, 8], strides = [1, 1]} : vector<16x96xbf16> to vector<8x8xbf16>
    %67 = vector.extract_strided_slice %7 {offsets = [0, 88], sizes = [8, 8], strides = [1, 1]} : vector<16x96xbf16> to vector<8x8xbf16>
    %cst_25 = arith.constant dense<0.000000e+00> : vector<8x8xf32>
    %68 = tpu.matmul %65, %66, %cst_25 {dimension_numbers = #tpu.dot_dimension_numbers<[1], [1], [0], [0], [0, 0, 1, 0], [], []>} : vector<8x8xbf16>, vector<8x8xbf16>, vector<8x8xf32> -> vector<8x8xf32>
    %cst_26 = arith.constant dense<0xFF800000> : vector<8xf32>
    %69 = vector.multi_reduction <maximumf>, %68, %cst_26 [1] : vector<8x8xf32> to vector<8xf32>
    %70 = vector.shape_cast %69 : vector<8xf32> to vector<8x1xf32>
    %71 = vector.broadcast %70 : vector<8x1xf32> to vector<8x8xf32>
    %72 = arith.subf %68, %71 : vector<8x8xf32>
    %73 = math.exp %72 : vector<8x8xf32>
    %cst_27 = arith.constant dense<0.000000e+00> : vector<8xf32>
    %74 = vector.multi_reduction <add>, %73, %cst_27 [1] : vector<8x8xf32> to vector<8xf32>
    %75 = vector.shape_cast %74 : vector<8xf32> to vector<8x1xf32>
    %76 = arith.truncf %73 : vector<8x8xf32> to vector<8x8xbf16>
    %cst_28 = arith.constant dense<0.000000e+00> : vector<8x8xf32>
    %77 = tpu.matmul %76, %67, %cst_28 {dimension_numbers = #tpu.dot_dimension_numbers<[1], [0], [0], [1], [0, 0, 1, 1], [], []>} : vector<8x8xbf16>, vector<8x8xbf16>, vector<8x8xf32> -> vector<8x8xf32>
    %78 = tpu.reciprocal %75 {approx = true} : vector<8x1xf32> -> vector<8x1xf32>
    %79 = vector.broadcast %78 : vector<8x1xf32> to vector<8x8xf32>
    %80 = arith.mulf %77, %79 : vector<8x8xf32>
    %c0_29 = arith.constant 0 : index
    %c0_30 = arith.constant 0 : index
    %c24 = arith.constant 24 : index
    %81 = vector.load %arg4[%c0_29, %c0_30, %c24] : memref<2x8x32xf32, #tpu.memory_space<vmem>>, vector<1x8x8xf32>
    %82 = vector.shape_cast %81 : vector<1x8x8xf32> to vector<8x8xf32>
    %83 = vector.shape_cast %80 : vector<8x8xf32> to vector<1x8x8xf32>
    tpu.vector_store %arg4[%c0_29, %c0_30, %c24], %83 {strides = array<i32>} : memref<2x8x32xf32, #tpu.memory_space<vmem>>, vector<1x8x8xf32>,
    %84 = vector.extract_strided_slice %7 {offsets = [8, 0], sizes = [8, 8], strides = [1, 1]} : vector<16x96xbf16> to vector<8x8xbf16>
    %85 = vector.extract_strided_slice %7 {offsets = [8, 32], sizes = [8, 8], strides = [1, 1]} : vector<16x96xbf16> to vector<8x8xbf16>
    %86 = vector.extract_strided_slice %7 {offsets = [8, 64], sizes = [8, 8], strides = [1, 1]} : vector<16x96xbf16> to vector<8x8xbf16>
    %cst_31 = arith.constant dense<0.000000e+00> : vector<8x8xf32>
    %87 = tpu.matmul %84, %85, %cst_31 {dimension_numbers = #tpu.dot_dimension_numbers<[1], [1], [0], [0], [0, 0, 1, 0], [], []>} : vector<8x8xbf16>, vector<8x8xbf16>, vector<8x8xf32> -> vector<8x8xf32>
    %cst_32 = arith.constant dense<0xFF800000> : vector<8xf32>
    %88 = vector.multi_reduction <maximumf>, %87, %cst_32 [1] : vector<8x8xf32> to vector<8xf32>
    %89 = vector.shape_cast %88 : vector<8xf32> to vector<8x1xf32>
    %90 = vector.broadcast %89 : vector<8x1xf32> to vector<8x8xf32>
    %91 = arith.subf %87, %90 : vector<8x8xf32>
    %92 = math.exp %91 : vector<8x8xf32>
    %cst_33 = arith.constant dense<0.000000e+00> : vector<8xf32>
    %93 = vector.multi_reduction <add>, %92, %cst_33 [1] : vector<8x8xf32> to vector<8xf32>
    %94 = vector.shape_cast %93 : vector<8xf32> to vector<8x1xf32>
    %95 = arith.truncf %92 : vector<8x8xf32> to vector<8x8xbf16>
    %cst_34 = arith.constant dense<0.000000e+00> : vector<8x8xf32>
    %96 = tpu.matmul %95, %86, %cst_34 {dimension_numbers = #tpu.dot_dimension_numbers<[1], [0], [0], [1], [0, 0, 1, 1], [], []>} : vector<8x8xbf16>, vector<8x8xbf16>, vector<8x8xf32> -> vector<8x8xf32>
    %97 = tpu.reciprocal %94 {approx = true} : vector<8x1xf32> -> vector<8x1xf32>
    %98 = vector.broadcast %97 : vector<8x1xf32> to vector<8x8xf32>
    %99 = arith.mulf %96, %98 : vector<8x8xf32>
    %c1 = arith.constant 1 : index
    %c0_35 = arith.constant 0 : index
    %c0_36 = arith.constant 0 : index
    %100 = vector.load %arg4[%c1, %c0_35, %c0_36] : memref<2x8x32xf32, #tpu.memory_space<vmem>>, vector<1x8x8xf32>
    %101 = vector.shape_cast %100 : vector<1x8x8xf32> to vector<8x8xf32>
    %102 = vector.shape_cast %99 : vector<8x8xf32> to vector<1x8x8xf32>
    tpu.vector_store %arg4[%c1, %c0_35, %c0_36], %102 {strides = array<i32>} : memref<2x8x32xf32, #tpu.memory_space<vmem>>, vector<1x8x8xf32>,
    %103 = vector.extract_strided_slice %7 {offsets = [8, 8], sizes = [8, 8], strides = [1, 1]} : vector<16x96xbf16> to vector<8x8xbf16>
    %104 = vector.extract_strided_slice %7 {offsets = [8, 40], sizes = [8, 8], strides = [1, 1]} : vector<16x96xbf16> to vector<8x8xbf16>
    %105 = vector.extract_strided_slice %7 {offsets = [8, 72], sizes = [8, 8], strides = [1, 1]} : vector<16x96xbf16> to vector<8x8xbf16>
    %cst_37 = arith.constant dense<0.000000e+00> : vector<8x8xf32>
    %106 = tpu.matmul %103, %104, %cst_37 {dimension_numbers = #tpu.dot_dimension_numbers<[1], [1], [0], [0], [0, 0, 1, 0], [], []>} : vector<8x8xbf16>, vector<8x8xbf16>, vector<8x8xf32> -> vector<8x8xf32>
    %cst_38 = arith.constant dense<0xFF800000> : vector<8xf32>
    %107 = vector.multi_reduction <maximumf>, %106, %cst_38 [1] : vector<8x8xf32> to vector<8xf32>
    %108 = vector.shape_cast %107 : vector<8xf32> to vector<8x1xf32>
    %109 = vector.broadcast %108 : vector<8x1xf32> to vector<8x8xf32>
    %110 = arith.subf %106, %109 : vector<8x8xf32>
    %111 = math.exp %110 : vector<8x8xf32>
    %cst_39 = arith.constant dense<0.000000e+00> : vector<8xf32>
    %112 = vector.multi_reduction <add>, %111, %cst_39 [1] : vector<8x8xf32> to vector<8xf32>
    %113 = vector.shape_cast %112 : vector<8xf32> to vector<8x1xf32>
    %114 = arith.truncf %111 : vector<8x8xf32> to vector<8x8xbf16>
    %cst_40 = arith.constant dense<0.000000e+00> : vector<8x8xf32>
    %115 = tpu.matmul %114, %105, %cst_40 {dimension_numbers = #tpu.dot_dimension_numbers<[1], [0], [0], [1], [0, 0, 1, 1], [], []>} : vector<8x8xbf16>, vector<8x8xbf16>, vector<8x8xf32> -> vector<8x8xf32>
    %116 = tpu.reciprocal %113 {approx = true} : vector<8x1xf32> -> vector<8x1xf32>
    %117 = vector.broadcast %116 : vector<8x1xf32> to vector<8x8xf32>
    %118 = arith.mulf %115, %117 : vector<8x8xf32>
    %c1_41 = arith.constant 1 : index
    %c0_42 = arith.constant 0 : index
    %c8_43 = arith.constant 8 : index
    %119 = vector.load %arg4[%c1_41, %c0_42, %c8_43] : memref<2x8x32xf32, #tpu.memory_space<vmem>>, vector<1x8x8xf32>
    %120 = vector.shape_cast %119 : vector<1x8x8xf32> to vector<8x8xf32>
    %121 = vector.shape_cast %118 : vector<8x8xf32> to vector<1x8x8xf32>
    tpu.vector_store %arg4[%c1_41, %c0_42, %c8_43], %121 {strides = array<i32>} : memref<2x8x32xf32, #tpu.memory_space<vmem>>, vector<1x8x8xf32>,
    %122 = vector.extract_strided_slice %7 {offsets = [8, 16], sizes = [8, 8], strides = [1, 1]} : vector<16x96xbf16> to vector<8x8xbf16>
    %123 = vector.extract_strided_slice %7 {offsets = [8, 48], sizes = [8, 8], strides = [1, 1]} : vector<16x96xbf16> to vector<8x8xbf16>
    %124 = vector.extract_strided_slice %7 {offsets = [8, 80], sizes = [8, 8], strides = [1, 1]} : vector<16x96xbf16> to vector<8x8xbf16>
    %cst_44 = arith.constant dense<0.000000e+00> : vector<8x8xf32>
    %125 = tpu.matmul %122, %123, %cst_44 {dimension_numbers = #tpu.dot_dimension_numbers<[1], [1], [0], [0], [0, 0, 1, 0], [], []>} : vector<8x8xbf16>, vector<8x8xbf16>, vector<8x8xf32> -> vector<8x8xf32>
    %cst_45 = arith.constant dense<0xFF800000> : vector<8xf32>
    %126 = vector.multi_reduction <maximumf>, %125, %cst_45 [1] : vector<8x8xf32> to vector<8xf32>
    %127 = vector.shape_cast %126 : vector<8xf32> to vector<8x1xf32>
    %128 = vector.broadcast %127 : vector<8x1xf32> to vector<8x8xf32>
    %129 = arith.subf %125, %128 : vector<8x8xf32>
    %130 = math.exp %129 : vector<8x8xf32>
    %cst_46 = arith.constant dense<0.000000e+00> : vector<8xf32>
    %131 = vector.multi_reduction <add>, %130, %cst_46 [1] : vector<8x8xf32> to vector<8xf32>
    %132 = vector.shape_cast %131 : vector<8xf32> to vector<8x1xf32>
    %133 = arith.truncf %130 : vector<8x8xf32> to vector<8x8xbf16>
    %cst_47 = arith.constant dense<0.000000e+00> : vector<8x8xf32>
    %134 = tpu.matmul %133, %124, %cst_47 {dimension_numbers = #tpu.dot_dimension_numbers<[1], [0], [0], [1], [0, 0, 1, 1], [], []>} : vector<8x8xbf16>, vector<8x8xbf16>, vector<8x8xf32> -> vector<8x8xf32>
    %135 = tpu.reciprocal %132 {approx = true} : vector<8x1xf32> -> vector<8x1xf32>
    %136 = vector.broadcast %135 : vector<8x1xf32> to vector<8x8xf32>
    %137 = arith.mulf %134, %136 : vector<8x8xf32>
    %c1_48 = arith.constant 1 : index
    %c0_49 = arith.constant 0 : index
    %c16_50 = arith.constant 16 : index
    %138 = vector.load %arg4[%c1_48, %c0_49, %c16_50] : memref<2x8x32xf32, #tpu.memory_space<vmem>>, vector<1x8x8xf32>
    %139 = vector.shape_cast %138 : vector<1x8x8xf32> to vector<8x8xf32>
    %140 = vector.shape_cast %137 : vector<8x8xf32> to vector<1x8x8xf32>
    tpu.vector_store %arg4[%c1_48, %c0_49, %c16_50], %140 {strides = array<i32>} : memref<2x8x32xf32, #tpu.memory_space<vmem>>, vector<1x8x8xf32>,
    %141 = vector.extract_strided_slice %7 {offsets = [8, 24], sizes = [8, 8], strides = [1, 1]} : vector<16x96xbf16> to vector<8x8xbf16>
    %142 = vector.extract_strided_slice %7 {offsets = [8, 56], sizes = [8, 8], strides = [1, 1]} : vector<16x96xbf16> to vector<8x8xbf16>
    %143 = vector.extract_strided_slice %7 {offsets = [8, 88], sizes = [8, 8], strides = [1, 1]} : vector<16x96xbf16> to vector<8x8xbf16>
    %cst_51 = arith.constant dense<0.000000e+00> : vector<8x8xf32>
    %144 = tpu.matmul %141, %142, %cst_51 {dimension_numbers = #tpu.dot_dimension_numbers<[1], [1], [0], [0], [0, 0, 1, 0], [], []>} : vector<8x8xbf16>, vector<8x8xbf16>, vector<8x8xf32> -> vector<8x8xf32>
    %cst_52 = arith.constant dense<0xFF800000> : vector<8xf32>
    %145 = vector.multi_reduction <maximumf>, %144, %cst_52 [1] : vector<8x8xf32> to vector<8xf32>
    %146 = vector.shape_cast %145 : vector<8xf32> to vector<8x1xf32>
    %147 = vector.broadcast %146 : vector<8x1xf32> to vector<8x8xf32>
    %148 = arith.subf %144, %147 : vector<8x8xf32>
    %149 = math.exp %148 : vector<8x8xf32>
    %cst_53 = arith.constant dense<0.000000e+00> : vector<8xf32>
    %150 = vector.multi_reduction <add>, %149, %cst_53 [1] : vector<8x8xf32> to vector<8xf32>
    %151 = vector.shape_cast %150 : vector<8xf32> to vector<8x1xf32>
    %152 = arith.truncf %149 : vector<8x8xf32> to vector<8x8xbf16>
    %cst_54 = arith.constant dense<0.000000e+00> : vector<8x8xf32>
    %153 = tpu.matmul %152, %143, %cst_54 {dimension_numbers = #tpu.dot_dimension_numbers<[1], [0], [0], [1], [0, 0, 1, 1], [], []>} : vector<8x8xbf16>, vector<8x8xbf16>, vector<8x8xf32> -> vector<8x8xf32>
    %154 = tpu.reciprocal %151 {approx = true} : vector<8x1xf32> -> vector<8x1xf32>
    %155 = vector.broadcast %154 : vector<8x1xf32> to vector<8x8xf32>
    %156 = arith.mulf %153, %155 : vector<8x8xf32>
    %c1_55 = arith.constant 1 : index
    %c0_56 = arith.constant 0 : index
    %c24_57 = arith.constant 24 : index
    %157 = vector.load %arg4[%c1_55, %c0_56, %c24_57] : memref<2x8x32xf32, #tpu.memory_space<vmem>>, vector<1x8x8xf32>
    %158 = vector.shape_cast %157 : vector<1x8x8xf32> to vector<8x8xf32>
    %159 = vector.shape_cast %156 : vector<8x8xf32> to vector<1x8x8xf32>
    tpu.vector_store %arg4[%c1_55, %c0_56, %c24_57], %159 {strides = array<i32>} : memref<2x8x32xf32, #tpu.memory_space<vmem>>, vector<1x8x8xf32>,
    return
  }
  func.func @transform_0(%arg0: i32) -> (i32, i32, i32) {
    %c0_i32 = arith.constant 0 : i32
    %c0_i32_0 = arith.constant 0 : i32
    %c0_i32_1 = arith.constant 0 : i32
    return %arg0, %c0_i32, %c0_i32_0 : i32, i32, i32
  }
  func.func @transform_1(%arg0: i32) -> (i32, i32) {
    %c0_i32 = arith.constant 0 : i32
    %c0_i32_0 = arith.constant 0 : i32
    %c0_i32_1 = arith.constant 0 : i32
    return %c0_i32, %c0_i32_0 : i32, i32
  }
  func.func @transform_2(%arg0: i32) -> (i32, i32) {
    %c0_i32 = arith.constant 0 : i32
    %c0_i32_0 = arith.constant 0 : i32
    %c0_i32_1 = arith.constant 0 : i32
    return %c0_i32, %c0_i32_0 : i32, i32
  }
  func.func @transform_3(%arg0: i32) -> (i32, i32, i32) {
    %c0_i32 = arith.constant 0 : i32
    %c0_i32_0 = arith.constant 0 : i32
    %c0_i32_1 = arith.constant 0 : i32
    return %arg0, %c0_i32, %c0_i32_0 : i32, i32, i32
  }
}

</mosaic_0001>

<llo_original>
// kernel: tpu_custom_call.1
$region0: #{tpu_custom_call.1}
  #allocation0 [shape = 'u32[]', space=smem, size = 0x4, offset = 0x4, fixed_abs, tag = 'smem constant byte address 0x4 - core index']
  #allocation1 [shape = 'u32[144,128]{1,0:T(1,128)}', space=vmem, size = 0x12000, scoped, tag = 'internal scratch']
  %s0 = inlined_call_operand.hbm [shape: bf16[2,8,32], index: 0, kind: input, shape index: {}]
  %s1 = inlined_call_operand.hbm [shape: bf16[32,96], index: 1, kind: input, shape index: {}]
  %s2 = inlined_call_operand.vmem [shape: f32[1,96], index: 2, kind: input, shape index: {}]
  %s3 = inlined_call_operand.hbm [shape: f32[2,8,32], index: 3, kind: output, shape index: {}]
  %s4 = sld [smem:[#allocation0]]
  $region30: #{tpu_custom_call.1} parent=0
    _
  %s6 = ssub.s32 1, %s4
  %s7 = scalar_select 0, %s6, %s4
  $region1: #{tpu_custom_call.1} parent=0
    #allocation2 [shape = 'u8[4096]{0}', space=vmem, size = 0x1000, scoped, tag = 'input window, operand 0, single buffered']
    #allocation3 [shape = 's32[1]{0}', space=sflag, size = 0x4, scoped, tag = 'scoped memory for tpu_custom_call.1']
    #allocation4 [shape = 's32[1]{0}', space=sflag, size = 0x4, scoped, tag = 'scoped memory for tpu_custom_call.1']
    #allocation5 [shape = 'u8[8192]{0}', space=vmem, size = 0x2000, scoped, tag = 'input window, operand 1, single buffered']
    #allocation6 [shape = 's32[1]{0}', space=sflag, size = 0x4, scoped, tag = 'scoped memory for tpu_custom_call.1']
    #allocation7 [shape = 'u8[8192]{0}', space=vmem, size = 0x2000, scoped, tag = 'output window, operand 0, single buffered']
    %8 = vsyncpa [#allocation3], 0
    %9 = vsyncpa [#allocation6], 0
    %10 = vsyncpa [#allocation4], 0
    // Predicated region
    $region2: #{tpu_custom_call.1} parent=1 // pred_check
      _
    $region3: #{tpu_custom_call.1} parent=1 // pred_check_branch
      %12 = sbr.rel (0) target = $region5
    $region4: #{tpu_custom_call.1} parent=1 // pred_region
      %s14 = ssub.s32 128, 128
      %15 = vsyncadd [#allocation3], %s14
      %s16 = sshll.u32 [#allocation2], 4
      %s17 = int_to_ptr.vmem [resolvable:$true] %s16
      %22 = dma.hbm_to_vmem [thread:$0]  %s0, 128, %s17, [#allocation3], 64, 64, 4
    $region5: #{tpu_custom_call.1} parent=1 // pred_fallthru
      _
    // Predicated region
    $region6: #{tpu_custom_call.1} parent=1 // pred_check
      _
    $region7: #{tpu_custom_call.1} parent=1 // pred_check_branch
      %24 = sbr.rel (0) target = $region9
    $region8: #{tpu_custom_call.1} parent=1 // pred_region
      %s26 = ssub.s32 256, 256
      %27 = vsyncadd [#allocation6], %s26
      %s28 = sshll.u32 [#allocation5], 4
      %s29 = int_to_ptr.vmem [resolvable:$true] %s28
      %34 = dma.hbm_to_vmem [thread:$0]  %s1, 256, %s29, [#allocation6], 64, 64, 4
    $region9: #{tpu_custom_call.1} parent=1 // pred_fallthru
      _
    // Predicated region
    $region10: #{tpu_custom_call.1} parent=1 // pred_check
      _
    $region11: #{tpu_custom_call.1} parent=1 // pred_check_branch
      %36 = sbr.rel (0) target = $region13
    $region12: #{tpu_custom_call.1} parent=1 // pred_region
      _
    $region13: #{tpu_custom_call.1} parent=1 // pred_fallthru
      _
    // Predicated region
    $region14: #{tpu_custom_call.1} parent=1 // pred_check
      _
    $region15: #{tpu_custom_call.1} parent=1 // pred_check_branch
      %38 = sbr.rel (0) target = $region17
    $region16: #{tpu_custom_call.1} parent=1 // pred_region
      %39 = dma.done [#allocation3], 128
    $region17: #{tpu_custom_call.1} parent=1 // pred_fallthru
      _
    // Predicated region
    $region18: #{tpu_custom_call.1} parent=1 // pred_check
      _
    $region19: #{tpu_custom_call.1} parent=1 // pred_check_branch
      %41 = sbr.rel (0) target = $region21
    $region20: #{tpu_custom_call.1} parent=1 // pred_region
      %42 = dma.done [#allocation6], 256
    $region21: #{tpu_custom_call.1} parent=1 // pred_fallthru
      _
    %v44 = vld [vmem:[#allocation2] sm:$0xf]
    %v45 = vld [vmem:[#allocation2 + $0x4] sm:$0xf]
    %v46 = vld [vmem:[#allocation5] sm:$0xf]
    %v47 = vld [vmem:[#allocation5 + $0x4] sm:$0xf]
    %v48 = vld [vmem:[#allocation5 + $0x8] sm:$0xf]
    %v49 = vld [vmem:[#allocation5 + $0xc] sm:$0xf]
    %v50 = vld [vmem:[%s2] sm:$0x1]
    %v52 = vlaneseq
    %v53 = vshrl.u32 %v52, 7
    %v54 = vsub.s32 0, %v53
    %v55 = vrot.slane %v50, %v54
    %v59 = vunpack.c.l.b16 %v44
    %v60 = vunpack.c.l.b16 %v45
    %v61 = vpack.c.b16 %v60, %v59
    %v66 = vunpack.c.l.b16 %v46
    %v67 = vunpack.c.l.b16 %v47
    %v68 = vunpack.c.l.b16 %v48
    %v69 = vunpack.c.l.b16 %v49
    %v70 = vpack.c.b16 %v67, %v66
    %v71 = vpack.c.b16 %v69, %v68
    %vm74 = vcmask 261120
    %v76 = vsel %vm74, %v61, 0
    %78 = vmatprep.subr.bf16.mxu0 0
    %79 = vmatpush1.bf16.msra.mxu0 %v70
    %80 = vmatprep.subr.bf16.mxu0 0
    %81 = vmatpush1.bf16.msra.mxu0 %v71
    %82 = vmatprep.subr.bf16.mxu0 0
    %83 = vmatpush1.bf16.msra.mxu0 0
    %84 = vmatprep.subr.bf16.mxu0 0
    %85 = vmatpush1.bf16.msra.mxu0 0
    %86 = vmatprep.subr.bf16.mxu0 0
    %87 = vmatpush1.bf16.msra.mxu0 0
    %88 = vmatprep.subr.bf16.mxu0 0
    %89 = vmatpush1.bf16.msra.mxu0 0
    %90 = vmatprep.subr.bf16.mxu0 0
    %91 = vmatpush1.bf16.msra.mxu0 0
    %92 = vmatprep.subr.bf16.mxu0 0
    %93 = vmatpush1.bf16.msra.mxu0 0
    %94 = vmatprep.subr.bf16.mxu0 0
    %95 = vmatpush1.bf16.msra.mxu0 0
    %96 = vmatprep.subr.bf16.mxu0 0
    %97 = vmatpush1.bf16.msra.mxu0 0
    %98 = vmatprep.subr.bf16.mxu0 0
    %99 = vmatpush1.bf16.msra.mxu0 0
    %100 = vmatprep.subr.bf16.mxu0 0
    %101 = vmatpush1.bf16.msra.mxu0 0
    %102 = vmatprep.subr.bf16.mxu0 0
    %103 = vmatpush1.bf16.msra.mxu0 0
    %104 = vmatprep.subr.bf16.mxu0 0
    %105 = vmatpush1.bf16.msra.mxu0 0
    %106 = vmatprep.subr.bf16.mxu0 0
    %107 = vmatpush1.bf16.msra.mxu0 0
    %108 = vmatprep.subr.bf16.mxu0 0
    %109 = vmatpush1.bf16.msra.mxu0 0
    %110 = vmatprep.mubr.bf16.mxu0 0
    %111 = vmatmul.mubr.bf16.gmra.mrb[0].mxu0 %v76
    %v112 = vpop.f32.mrb[0].mxu0
    %v113 = vadd.f32 %v55, %v112
    %v114 = vpop.f32.mrb[0].mxu0
    %v115 = vpop.f32.mrb[0].mxu0
    %v116 = vadd.f32 %v55, %v115
    %v117 = vpop.f32.mrb[0].mxu0
    %118 = vdwg.mxu0
    %v119 = vpack.c.bf16 %v116, %v113
    %121 = vrot.lane.b32.xlu0 %v119, 96
    %v122 = vpop.permute.xlu0 %121
    %vm123 = vcmask 64512
    %v125 = vsel %vm123, %v119, 0
    %v128 = vsel %vm123, %v122, 0
    %130 = vmatprep.subr.bf16.mxu0 0
    %131 = vmatpush1.bf16.xpose.msra.mxu0 %v128
    %132 = vmatprep.subr.bf16.mxu0 0
    %133 = vmatpush1.bf16.xpose.msra.mxu0 0
    %134 = vmatprep.subr.bf16.mxu0 0
    %135 = vmatpush1.bf16.xpose.msra.mxu0 0
    %136 = vmatprep.subr.bf16.mxu0 0
    %137 = vmatpush1.bf16.xpose.msra.mxu0 0
    %138 = vmatprep.subr.bf16.mxu0 0
    %139 = vmatpush1.bf16.xpose.msra.mxu0 0
    %140 = vmatprep.subr.bf16.mxu0 0
    %141 = vmatpush1.bf16.xpose.msra.mxu0 0
    %142 = vmatprep.subr.bf16.mxu0 0
    %143 = vmatpush1.bf16.xpose.msra.mxu0 0
    %144 = vmatprep.subr.bf16.mxu0 0
    %145 = vmatpush1.bf16.xpose.msra.mxu0 0
    %146 = vmatprep.subr.bf16.mxu0 0
    %147 = vmatpush1.bf16.xpose.msra.mxu0 0
    %148 = vmatprep.subr.bf16.mxu0 0
    %149 = vmatpush1.bf16.xpose.msra.mxu0 0
    %150 = vmatprep.subr.bf16.mxu0 0
    %151 = vmatpush1.bf16.xpose.msra.mxu0 0
    %152 = vmatprep.subr.bf16.mxu0 0
    %153 = vmatpush1.bf16.xpose.msra.mxu0 0
    %154 = vmatprep.subr.bf16.mxu0 0
    %155 = vmatpush1.bf16.xpose.msra.mxu0 0
    %156 = vmatprep.subr.bf16.mxu0 0
    %157 = vmatpush1.bf16.xpose.msra.mxu0 0
    %158 = vmatprep.subr.bf16.mxu0 0
    %159 = vmatpush1.bf16.xpose.msra.mxu0 0
    %160 = vmatprep.subr.bf16.mxu0 0
    %161 = vmatpush1.bf16.xpose.msra.mxu0 0
    %162 = vmatprep.mubr.bf16.mxu0 0
    %163 = vmatmul.mubr.bf16.gmra.mrb[0].mxu0 %v125
    %v164 = vpop.f32.mrb[0].mxu0
    %v165 = vadd.f32 0.0, %v164
    %v166 = vpop.f32.mrb[0].mxu0
    %v167 = vpop.f32.mrb[0].mxu0
    %v168 = vpop.f32.mrb[0].mxu0
    %169 = vdwg.mxu0
    %v170 = vsel %vm123, %v165, -inf
    %171 = vmax.xlane.f32.xlu0 %v170
    %v172 = vpop.xlane.xlu0 %171
    %v173 = vsub.f32 %v165, %v172
    %v174 = vmul.f32 %v173, 1.442695
    %v175 = vpow.pop %v174
    %v176 = vsel %vm123, %v175, 0.0
    %177 = vadd.xlane.f32.xlu0 %v176
    %v178 = vpop.xlane.xlu0 %177
    %v179 = vpack.c.bf16 %v175, %v175
    %180 = vrot.lane.b32.xlu0 %v119, 64
    %v181 = vpop.permute.xlu0 %180
    %v183 = vsel %vm123, %v179, 0
    %vm185 = vcmask 1043456
    %v187 = vsel %vm185, %v181, 0
    %189 = vmatprep.subr.bf16.mxu0 0
    %190 = vmatpush1.bf16.msra.mxu0 %v187
    %191 = vmatprep.subr.bf16.mxu0 0
    %192 = vmatpush1.bf16.msra.mxu0 0
    %193 = vmatprep.subr.bf16.mxu0 0
    %194 = vmatpush1.bf16.msra.mxu0 0
    %195 = vmatprep.subr.bf16.mxu0 0
    %196 = vmatpush1.bf16.msra.mxu0 0
    %197 = vmatprep.subr.bf16.mxu0 0
    %198 = vmatpush1.bf16.msra.mxu0 0
    %199 = vmatprep.subr.bf16.mxu0 0
    %200 = vmatpush1.bf16.msra.mxu0 0
    %201 = vmatprep.subr.bf16.mxu0 0
    %202 = vmatpush1.bf16.msra.mxu0 0
    %203 = vmatprep.subr.bf16.mxu0 0
    %204 = vmatpush1.bf16.msra.mxu0 0
    %205 = vmatprep.subr.bf16.mxu0 0
    %206 = vmatpush1.bf16.msra.mxu0 0
    %207 = vmatprep.subr.bf16.mxu0 0
    %208 = vmatpush1.bf16.msra.mxu0 0
    %209 = vmatprep.subr.bf16.mxu0 0
    %210 = vmatpush1.bf16.msra.mxu0 0
    %211 = vmatprep.subr.bf16.mxu0 0
    %212 = vmatpush1.bf16.msra.mxu0 0
    %213 = vmatprep.subr.bf16.mxu0 0
    %214 = vmatpush1.bf16.msra.mxu0 0
    %215 = vmatprep.subr.bf16.mxu0 0
    %216 = vmatpush1.bf16.msra.mxu0 0
    %217 = vmatprep.subr.bf16.mxu0 0
    %218 = vmatpush1.bf16.msra.mxu0 0
    %219 = vmatprep.subr.bf16.mxu0 0
    %220 = vmatpush1.bf16.msra.mxu0 0
    %221 = vmatprep.mubr.bf16.mxu0 0
    %222 = vmatmul.mubr.bf16.gmra.mrb[0].mxu0 %v183
    %v223 = vpop.f32.mrb[0].mxu0
    %v224 = vadd.f32 0.0, %v223
    %v225 = vpop.f32.mrb[0].mxu0
    %v226 = vpop.f32.mrb[0].mxu0
    %v227 = vpop.f32.mrb[0].mxu0
    %228 = vdwg.mxu0
    %v229 = vrcp.pop %v178
    %v230 = vmul.f32 %v224, %v229
    %231 = vst.msk [vmem:[#allocation7] sm:$0xff] %vm123, %v230
    %232 = vrot.lane.b32.xlu0 %v119, 120
    %v233 = vpop.permute.xlu0 %232
    %234 = vrot.lane.b32.xlu0 %v119, 88
    %v235 = vpop.permute.xlu0 %234
    %v237 = vsel %vm123, %v233, 0
    %v240 = vsel %vm123, %v235, 0
    %242 = vmatprep.subr.bf16.mxu0 0
    %243 = vmatpush1.bf16.xpose.msra.mxu0 %v240
    %244 = vmatprep.subr.bf16.mxu0 0
    %245 = vmatpush1.bf16.xpose.msra.mxu0 0
    %246 = vmatprep.subr.bf16.mxu0 0
    %247 = vmatpush1.bf16.xpose.msra.mxu0 0
    %248 = vmatprep.subr.bf16.mxu0 0
    %249 = vmatpush1.bf16.xpose.msra.mxu0 0
    %250 = vmatprep.subr.bf16.mxu0 0
    %251 = vmatpush1.bf16.xpose.msra.mxu0 0
    %252 = vmatprep.subr.bf16.mxu0 0
    %253 = vmatpush1.bf16.xpose.msra.mxu0 0
    %254 = vmatprep.subr.bf16.mxu0 0
    %255 = vmatpush1.bf16.xpose.msra.mxu0 0
    %256 = vmatprep.subr.bf16.mxu0 0
    %257 = vmatpush1.bf16.xpose.msra.mxu0 0
    %258 = vmatprep.subr.bf16.mxu0 0
    %259 = vmatpush1.bf16.xpose.msra.mxu0 0
    %260 = vmatprep.subr.bf16.mxu0 0
    %261 = vmatpush1.bf16.xpose.msra.mxu0 0
    %262 = vmatprep.subr.bf16.mxu0 0
    %263 = vmatpush1.bf16.xpose.msra.mxu0 0
    %264 = vmatprep.subr.bf16.mxu0 0
    %265 = vmatpush1.bf16.xpose.msra.mxu0 0
    %266 = vmatprep.subr.bf16.mxu0 0
    %267 = vmatpush1.bf16.xpose.msra.mxu0 0
    %268 = vmatprep.subr.bf16.mxu0 0
    %269 = vmatpush1.bf16.xpose.msra.mxu0 0
    %270 = vmatprep.subr.bf16.mxu0 0
    %271 = vmatpush1.bf16.xpose.msra.mxu0 0
    %272 = vmatprep.subr.bf16.mxu0 0
    %273 = vmatpush1.bf16.xpose.msra.mxu0 0
    %274 = vmatprep.mubr.bf16.mxu0 0
    %275 = vmatmul.mubr.bf16.gmra.mrb[0].mxu0 %v237
    %v276 = vpop.f32.mrb[0].mxu0
    %v277 = vadd.f32 0.0, %v276
    %v278 = vpop.f32.mrb[0].mxu0
    %v279 = vpop.f32.mrb[0].mxu0
    %v280 = vpop.f32.mrb[0].mxu0
    %281 = vdwg.mxu0
    %v282 = vsel %vm123, %v277, -inf
    %283 = vmax.xlane.f32.xlu0 %v282
    %v284 = vpop.xlane.xlu0 %283
    %v285 = vsub.f32 %v277, %v284
    %v286 = vmul.f32 %v285, 1.442695
    %v287 = vpow.pop %v286
    %v288 = vsel %vm123, %v287, 0.0
    %289 = vadd.xlane.f32.xlu0 %v288
    %v290 = vpop.xlane.xlu0 %289
    %v291 = vpack.c.bf16 %v287, %v287
    %292 = vrot.lane.b32.xlu0 %v119, 56
    %v293 = vpop.permute.xlu0 %292
    %v295 = vsel %vm123, %v291, 0
    %v298 = vsel %vm185, %v293, 0
    %300 = vmatprep.subr.bf16.mxu0 0
    %301 = vmatpush1.bf16.msra.mxu0 %v298
    %302 = vmatprep.subr.bf16.mxu0 0
    %303 = vmatpush1.bf16.msra.mxu0 0
    %304 = vmatprep.subr.bf16.mxu0 0
    %305 = vmatpush1.bf16.msra.mxu0 0
    %306 = vmatprep.subr.bf16.mxu0 0
    %307 = vmatpush1.bf16.msra.mxu0 0
    %308 = vmatprep.subr.bf16.mxu0 0
    %309 = vmatpush1.bf16.msra.mxu0 0
    %310 = vmatprep.subr.bf16.mxu0 0
    %311 = vmatpush1.bf16.msra.mxu0 0
    %312 = vmatprep.subr.bf16.mxu0 0
    %313 = vmatpush1.bf16.msra.mxu0 0
    %314 = vmatprep.subr.bf16.mxu0 0
    %315 = vmatpush1.bf16.msra.mxu0 0
    %316 = vmatprep.subr.bf16.mxu0 0
    %317 = vmatpush1.bf16.msra.mxu0 0
    %318 = vmatprep.subr.bf16.mxu0 0
    %319 = vmatpush1.bf16.msra.mxu0 0
    %320 = vmatprep.subr.bf16.mxu0 0
    %321 = vmatpush1.bf16.msra.mxu0 0
    %322 = vmatprep.subr.bf16.mxu0 0
    %323 = vmatpush1.bf16.msra.mxu0 0
    %324 = vmatprep.subr.bf16.mxu0 0
    %325 = vmatpush1.bf16.msra.mxu0 0
    %326 = vmatprep.subr.bf16.mxu0 0
    %327 = vmatpush1.bf16.msra.mxu0 0
    %328 = vmatprep.subr.bf16.mxu0 0
    %329 = vmatpush1.bf16.msra.mxu0 0
    %330 = vmatprep.subr.bf16.mxu0 0
    %331 = vmatpush1.bf16.msra.mxu0 0
    %332 = vmatprep.mubr.bf16.mxu0 0
    %333 = vmatmul.mubr.bf16.gmra.mrb[0].mxu0 %v295
    %v334 = vpop.f32.mrb[0].mxu0
    %v335 = vadd.f32 0.0, %v334
    %v336 = vpop.f32.mrb[0].mxu0
    %v337 = vpop.f32.mrb[0].mxu0
    %v338 = vpop.f32.mrb[0].mxu0
    %339 = vdwg.mxu0
    %v340 = vrcp.pop %v290
    %v341 = vmul.f32 %v335, %v340
    %343 = vrot.lane.b32.xlu0 %v341, 8
    %v344 = vpop.permute.xlu0 %343
    %vm346 = vcmask 130112
    %347 = vst.msk [vmem:[#allocation7] sm:$0xff] %vm346, %v344
    %348 = vrot.lane.b32.xlu0 %v119, 112
    %v349 = vpop.permute.xlu0 %348
    %350 = vrot.lane.b32.xlu0 %v119, 80
    %v351 = vpop.permute.xlu0 %350
    %v353 = vsel %vm123, %v349, 0
    %v356 = vsel %vm123, %v351, 0
    %358 = vmatprep.subr.bf16.mxu0 0
    %359 = vmatpush1.bf16.xpose.msra.mxu0 %v356
    %360 = vmatprep.subr.bf16.mxu0 0
    %361 = vmatpush1.bf16.xpose.msra.mxu0 0
    %362 = vmatprep.subr.bf16.mxu0 0
    %363 = vmatpush1.bf16.xpose.msra.mxu0 0
    %364 = vmatprep.subr.bf16.mxu0 0
    %365 = vmatpush1.bf16.xpose.msra.mxu0 0
    %366 = vmatprep.subr.bf16.mxu0 0
    %367 = vmatpush1.bf16.xpose.msra.mxu0 0
    %368 = vmatprep.subr.bf16.mxu0 0
    %369 = vmatpush1.bf16.xpose.msra.mxu0 0
    %370 = vmatprep.subr.bf16.mxu0 0
    %371 = vmatpush1.bf16.xpose.msra.mxu0 0
    %372 = vmatprep.subr.bf16.mxu0 0
    %373 = vmatpush1.bf16.xpose.msra.mxu0 0
    %374 = vmatprep.subr.bf16.mxu0 0
    %375 = vmatpush1.bf16.xpose.msra.mxu0 0
    %376 = vmatprep.subr.bf16.mxu0 0
    %377 = vmatpush1.bf16.xpose.msra.mxu0 0
    %378 = vmatprep.subr.bf16.mxu0 0
    %379 = vmatpush1.bf16.xpose.msra.mxu0 0
    %380 = vmatprep.subr.bf16.mxu0 0
    %381 = vmatpush1.bf16.xpose.msra.mxu0 0
    %382 = vmatprep.subr.bf16.mxu0 0
    %383 = vmatpush1.bf16.xpose.msra.mxu0 0
    %384 = vmatprep.subr.bf16.mxu0 0
    %385 = vmatpush1.bf16.xpose.msra.mxu0 0
    %386 = vmatprep.subr.bf16.mxu0 0
    %387 = vmatpush1.bf16.xpose.msra.mxu0 0
    %388 = vmatprep.subr.bf16.mxu0 0
    %389 = vmatpush1.bf16.xpose.msra.mxu0 0
    %390 = vmatprep.mubr.bf16.mxu0 0
    %391 = vmatmul.mubr.bf16.gmra.mrb[0].mxu0 %v353
    %v392 = vpop.f32.mrb[0].mxu0
    %v393 = vadd.f32 0.0, %v392
    %v394 = vpop.f32.mrb[0].mxu0
    %v395 = vpop.f32.mrb[0].mxu0
    %v396 = vpop.f32.mrb[0].mxu0
    %397 = vdwg.mxu0
    %v398 = vsel %vm123, %v393, -inf
    %399 = vmax.xlane.f32.xlu0 %v398
    %v400 = vpop.xlane.xlu0 %399
    %v401 = vsub.f32 %v393, %v400
    %v402 = vmul.f32 %v401, 1.442695
    %v403 = vpow.pop %v402
    %v404 = vsel %vm123, %v403, 0.0
    %405 = vadd.xlane.f32.xlu0 %v404
    %v406 = vpop.xlane.xlu0 %405
    %v407 = vpack.c.bf16 %v403, %v403
    %408 = vrot.lane.b32.xlu0 %v119, 48
    %v409 = vpop.permute.xlu0 %408
    %v411 = vsel %vm123, %v407, 0
    %v414 = vsel %vm185, %v409, 0
    %416 = vmatprep.subr.bf16.mxu0 0
    %417 = vmatpush1.bf16.msra.mxu0 %v414
    %418 = vmatprep.subr.bf16.mxu0 0
    %419 = vmatpush1.bf16.msra.mxu0 0
    %420 = vmatprep.subr.bf16.mxu0 0
    %421 = vmatpush1.bf16.msra.mxu0 0
    %422 = vmatprep.subr.bf16.mxu0 0
    %423 = vmatpush1.bf16.msra.mxu0 0
    %424 = vmatprep.subr.bf16.mxu0 0
    %425 = vmatpush1.bf16.msra.mxu0 0
    %426 = vmatprep.subr.bf16.mxu0 0
    %427 = vmatpush1.bf16.msra.mxu0 0
    %428 = vmatprep.subr.bf16.mxu0 0
    %429 = vmatpush1.bf16.msra.mxu0 0
    %430 = vmatprep.subr.bf16.mxu0 0
    %431 = vmatpush1.bf16.msra.mxu0 0
    %432 = vmatprep.subr.bf16.mxu0 0
    %433 = vmatpush1.bf16.msra.mxu0 0
    %434 = vmatprep.subr.bf16.mxu0 0
    %435 = vmatpush1.bf16.msra.mxu0 0
    %436 = vmatprep.subr.bf16.mxu0 0
    %437 = vmatpush1.bf16.msra.mxu0 0
    %438 = vmatprep.subr.bf16.mxu0 0
    %439 = vmatpush1.bf16.msra.mxu0 0
    %440 = vmatprep.subr.bf16.mxu0 0
    %441 = vmatpush1.bf16.msra.mxu0 0
    %442 = vmatprep.subr.bf16.mxu0 0
    %443 = vmatpush1.bf16.msra.mxu0 0
    %444 = vmatprep.subr.bf16.mxu0 0
    %445 = vmatpush1.bf16.msra.mxu0 0
    %446 = vmatprep.subr.bf16.mxu0 0
    %447 = vmatpush1.bf16.msra.mxu0 0
    %448 = vmatprep.mubr.bf16.mxu0 0
    %449 = vmatmul.mubr.bf16.gmra.mrb[0].mxu0 %v411
    %v450 = vpop.f32.mrb[0].mxu0
    %v451 = vadd.f32 0.0, %v450
    %v452 = vpop.f32.mrb[0].mxu0
    %v453 = vpop.f32.mrb[0].mxu0
    %v454 = vpop.f32.mrb[0].mxu0
    %455 = vdwg.mxu0
    %v456 = vrcp.pop %v406
    %v457 = vmul.f32 %v451, %v456
    %459 = vrot.lane.b32.xlu0 %v457, 16
    %v460 = vpop.permute.xlu0 %459
    %vm462 = vcmask 195712
    %463 = vst.msk [vmem:[#allocation7] sm:$0xff] %vm462, %v460
    %464 = vrot.lane.b32.xlu0 %v119, 104
    %v465 = vpop.permute.xlu0 %464
    %466 = vrot.lane.b32.xlu0 %v119, 72
    %v467 = vpop.permute.xlu0 %466
    %v469 = vsel %vm123, %v465, 0
    %v472 = vsel %vm123, %v467, 0
    %474 = vmatprep.subr.bf16.mxu0 0
    %475 = vmatpush1.bf16.xpose.msra.mxu0 %v472
    %476 = vmatprep.subr.bf16.mxu0 0
    %477 = vmatpush1.bf16.xpose.msra.mxu0 0
    %478 = vmatprep.subr.bf16.mxu0 0
    %479 = vmatpush1.bf16.xpose.msra.mxu0 0
    %480 = vmatprep.subr.bf16.mxu0 0
    %481 = vmatpush1.bf16.xpose.msra.mxu0 0
    %482 = vmatprep.subr.bf16.mxu0 0
    %483 = vmatpush1.bf16.xpose.msra.mxu0 0
    %484 = vmatprep.subr.bf16.mxu0 0
    %485 = vmatpush1.bf16.xpose.msra.mxu0 0
    %486 = vmatprep.subr.bf16.mxu0 0
    %487 = vmatpush1.bf16.xpose.msra.mxu0 0
    %488 = vmatprep.subr.bf16.mxu0 0
    %489 = vmatpush1.bf16.xpose.msra.mxu0 0
    %490 = vmatprep.subr.bf16.mxu0 0
    %491 = vmatpush1.bf16.xpose.msra.mxu0 0
    %492 = vmatprep.subr.bf16.mxu0 0
    %493 = vmatpush1.bf16.xpose.msra.mxu0 0
    %494 = vmatprep.subr.bf16.mxu0 0
    %495 = vmatpush1.bf16.xpose.msra.mxu0 0
    %496 = vmatprep.subr.bf16.mxu0 0
    %497 = vmatpush1.bf16.xpose.msra.mxu0 0
    %498 = vmatprep.subr.bf16.mxu0 0
    %499 = vmatpush1.bf16.xpose.msra.mxu0 0
    %500 = vmatprep.subr.bf16.mxu0 0
    %501 = vmatpush1.bf16.xpose.msra.mxu0 0
    %502 = vmatprep.subr.bf16.mxu0 0
    %503 = vmatpush1.bf16.xpose.msra.mxu0 0
    %504 = vmatprep.subr.bf16.mxu0 0
    %505 = vmatpush1.bf16.xpose.msra.mxu0 0
    %506 = vmatprep.mubr.bf16.mxu0 0
    %507 = vmatmul.mubr.bf16.gmra.mrb[0].mxu0 %v469
    %v508 = vpop.f32.mrb[0].mxu0
    %v509 = vadd.f32 0.0, %v508
    %v510 = vpop.f32.mrb[0].mxu0
    %v511 = vpop.f32.mrb[0].mxu0
    %v512 = vpop.f32.mrb[0].mxu0
    %513 = vdwg.mxu0
    %v514 = vsel %vm123, %v509, -inf
    %515 = vmax.xlane.f32.xlu0 %v514
    %v516 = vpop.xlane.xlu0 %515
    %v517 = vsub.f32 %v509, %v516
    %v518 = vmul.f32 %v517, 1.442695
    %v519 = vpow.pop %v518
    %v520 = vsel %vm123, %v519, 0.0
    %521 = vadd.xlane.f32.xlu0 %v520
    %v522 = vpop.xlane.xlu0 %521
    %v523 = vpack.c.bf16 %v519, %v519
    %524 = vrot.lane.b32.xlu0 %v119, 40
    %v525 = vpop.permute.xlu0 %524
    %v527 = vsel %vm123, %v523, 0
    %v530 = vsel %vm185, %v525, 0
    %532 = vmatprep.subr.bf16.mxu0 0
    %533 = vmatpush1.bf16.msra.mxu0 %v530
    %534 = vmatprep.subr.bf16.mxu0 0
    %535 = vmatpush1.bf16.msra.mxu0 0
    %536 = vmatprep.subr.bf16.mxu0 0
    %537 = vmatpush1.bf16.msra.mxu0 0
    %538 = vmatprep.subr.bf16.mxu0 0
    %539 = vmatpush1.bf16.msra.mxu0 0
    %540 = vmatprep.subr.bf16.mxu0 0
    %541 = vmatpush1.bf16.msra.mxu0 0
    %542 = vmatprep.subr.bf16.mxu0 0
    %543 = vmatpush1.bf16.msra.mxu0 0
    %544 = vmatprep.subr.bf16.mxu0 0
    %545 = vmatpush1.bf16.msra.mxu0 0
    %546 = vmatprep.subr.bf16.mxu0 0
    %547 = vmatpush1.bf16.msra.mxu0 0
    %548 = vmatprep.subr.bf16.mxu0 0
    %549 = vmatpush1.bf16.msra.mxu0 0
    %550 = vmatprep.subr.bf16.mxu0 0
    %551 = vmatpush1.bf16.msra.mxu0 0
    %552 = vmatprep.subr.bf16.mxu0 0
    %553 = vmatpush1.bf16.msra.mxu0 0
    %554 = vmatprep.subr.bf16.mxu0 0
    %555 = vmatpush1.bf16.msra.mxu0 0
    %556 = vmatprep.subr.bf16.mxu0 0
    %557 = vmatpush1.bf16.msra.mxu0 0
    %558 = vmatprep.subr.bf16.mxu0 0
    %559 = vmatpush1.bf16.msra.mxu0 0
    %560 = vmatprep.subr.bf16.mxu0 0
    %561 = vmatpush1.bf16.msra.mxu0 0
    %562 = vmatprep.subr.bf16.mxu0 0
    %563 = vmatpush1.bf16.msra.mxu0 0
    %564 = vmatprep.mubr.bf16.mxu0 0
    %565 = vmatmul.mubr.bf16.gmra.mrb[0].mxu0 %v527
    %v566 = vpop.f32.mrb[0].mxu0
    %v567 = vadd.f32 0.0, %v566
    %v568 = vpop.f32.mrb[0].mxu0
    %v569 = vpop.f32.mrb[0].mxu0
    %v570 = vpop.f32.mrb[0].mxu0
    %571 = vdwg.mxu0
    %v572 = vrcp.pop %v522
    %v573 = vmul.f32 %v567, %v572
    %575 = vrot.lane.b32.xlu0 %v573, 24
    %v576 = vpop.permute.xlu0 %575
    %vm578 = vcmask 261312
    %579 = vst.msk [vmem:[#allocation7] sm:$0xff] %vm578, %v576
    %v580 = vrot.slane %v119, 4
    %581 = vrot.lane.b32.xlu0 %v580, 96
    %v582 = vpop.permute.xlu0 %581
    %v584 = vsel %vm123, %v580, 0
    %v587 = vsel %vm123, %v582, 0
    %589 = vmatprep.subr.bf16.mxu0 0
    %590 = vmatpush1.bf16.xpose.msra.mxu0 %v587
    %591 = vmatprep.subr.bf16.mxu0 0
    %592 = vmatpush1.bf16.xpose.msra.mxu0 0
    %593 = vmatprep.subr.bf16.mxu0 0
    %594 = vmatpush1.bf16.xpose.msra.mxu0 0
    %595 = vmatprep.subr.bf16.mxu0 0
    %596 = vmatpush1.bf16.xpose.msra.mxu0 0
    %597 = vmatprep.subr.bf16.mxu0 0
    %598 = vmatpush1.bf16.xpose.msra.mxu0 0
    %599 = vmatprep.subr.bf16.mxu0 0
    %600 = vmatpush1.bf16.xpose.msra.mxu0 0
    %601 = vmatprep.subr.bf16.mxu0 0
    %602 = vmatpush1.bf16.xpose.msra.mxu0 0
    %603 = vmatprep.subr.bf16.mxu0 0
    %604 = vmatpush1.bf16.xpose.msra.mxu0 0
    %605 = vmatprep.subr.bf16.mxu0 0
    %606 = vmatpush1.bf16.xpose.msra.mxu0 0
    %607 = vmatprep.subr.bf16.mxu0 0
    %608 = vmatpush1.bf16.xpose.msra.mxu0 0
    %609 = vmatprep.subr.bf16.mxu0 0
    %610 = vmatpush1.bf16.xpose.msra.mxu0 0
    %611 = vmatprep.subr.bf16.mxu0 0
    %612 = vmatpush1.bf16.xpose.msra.mxu0 0
    %613 = vmatprep.subr.bf16.mxu0 0
    %614 = vmatpush1.bf16.xpose.msra.mxu0 0
    %615 = vmatprep.subr.bf16.mxu0 0
    %616 = vmatpush1.bf16.xpose.msra.mxu0 0
    %617 = vmatprep.subr.bf16.mxu0 0
    %618 = vmatpush1.bf16.xpose.msra.mxu0 0
    %619 = vmatprep.subr.bf16.mxu0 0
    %620 = vmatpush1.bf16.xpose.msra.mxu0 0
    %621 = vmatprep.mubr.bf16.mxu0 0
    %622 = vmatmul.mubr.bf16.gmra.mrb[0].mxu0 %v584
    %v623 = vpop.f32.mrb[0].mxu0
    %v624 = vadd.f32 0.0, %v623
    %v625 = vpop.f32.mrb[0].mxu0
    %v626 = vpop.f32.mrb[0].mxu0
    %v627 = vpop.f32.mrb[0].mxu0
    %628 = vdwg.mxu0
    %v629 = vsel %vm123, %v624, -inf
    %630 = vmax.xlane.f32.xlu0 %v629
    %v631 = vpop.xlane.xlu0 %630
    %v632 = vsub.f32 %v624, %v631
    %v633 = vmul.f32 %v632, 1.442695
    %v634 = vpow.pop %v633
    %v635 = vsel %vm123, %v634, 0.0
    %636 = vadd.xlane.f32.xlu0 %v635
    %v637 = vpop.xlane.xlu0 %636
    %v638 = vpack.c.bf16 %v634, %v634
    %639 = vrot.lane.b32.xlu0 %v580, 64
    %v640 = vpop.permute.xlu0 %639
    %v642 = vsel %vm123, %v638, 0
    %v645 = vsel %vm185, %v640, 0
    %647 = vmatprep.subr.bf16.mxu0 0
    %648 = vmatpush1.bf16.msra.mxu0 %v645
    %649 = vmatprep.subr.bf16.mxu0 0
    %650 = vmatpush1.bf16.msra.mxu0 0
    %651 = vmatprep.subr.bf16.mxu0 0
    %652 = vmatpush1.bf16.msra.mxu0 0
    %653 = vmatprep.subr.bf16.mxu0 0
    %654 = vmatpush1.bf16.msra.mxu0 0
    %655 = vmatprep.subr.bf16.mxu0 0
    %656 = vmatpush1.bf16.msra.mxu0 0
    %657 = vmatprep.subr.bf16.mxu0 0
    %658 = vmatpush1.bf16.msra.mxu0 0
    %659 = vmatprep.subr.bf16.mxu0 0
    %660 = vmatpush1.bf16.msra.mxu0 0
    %661 = vmatprep.subr.bf16.mxu0 0
    %662 = vmatpush1.bf16.msra.mxu0 0
    %663 = vmatprep.subr.bf16.mxu0 0
    %664 = vmatpush1.bf16.msra.mxu0 0
    %665 = vmatprep.subr.bf16.mxu0 0
    %666 = vmatpush1.bf16.msra.mxu0 0
    %667 = vmatprep.subr.bf16.mxu0 0
    %668 = vmatpush1.bf16.msra.mxu0 0
    %669 = vmatprep.subr.bf16.mxu0 0
    %670 = vmatpush1.bf16.msra.mxu0 0
    %671 = vmatprep.subr.bf16.mxu0 0
    %672 = vmatpush1.bf16.msra.mxu0 0
    %673 = vmatprep.subr.bf16.mxu0 0
    %674 = vmatpush1.bf16.msra.mxu0 0
    %675 = vmatprep.subr.bf16.mxu0 0
    %676 = vmatpush1.bf16.msra.mxu0 0
    %677 = vmatprep.subr.bf16.mxu0 0
    %678 = vmatpush1.bf16.msra.mxu0 0
    %679 = vmatprep.mubr.bf16.mxu0 0
    %680 = vmatmul.mubr.bf16.gmra.mrb[0].mxu0 %v642
    %v681 = vpop.f32.mrb[0].mxu0
    %v682 = vadd.f32 0.0, %v681
    %v683 = vpop.f32.mrb[0].mxu0
    %v684 = vpop.f32.mrb[0].mxu0
    %v685 = vpop.f32.mrb[0].mxu0
    %686 = vdwg.mxu0
    %v687 = vrcp.pop %v637
    %v688 = vmul.f32 %v682, %v687
    %s689 = scalar_lea.vmem [#allocation7], 8
    %690 = vst.msk [vmem:[%s689] sm:$0xff] %vm123, %v688
    %691 = vrot.lane.b32.xlu0 %v580, 120
    %v692 = vpop.permute.xlu0 %691
    %693 = vrot.lane.b32.xlu0 %v580, 88
    %v694 = vpop.permute.xlu0 %693
    %v696 = vsel %vm123, %v692, 0
    %v699 = vsel %vm123, %v694, 0
    %701 = vmatprep.subr.bf16.mxu0 0
    %702 = vmatpush1.bf16.xpose.msra.mxu0 %v699
    %703 = vmatprep.subr.bf16.mxu0 0
    %704 = vmatpush1.bf16.xpose.msra.mxu0 0
    %705 = vmatprep.subr.bf16.mxu0 0
    %706 = vmatpush1.bf16.xpose.msra.mxu0 0
    %707 = vmatprep.subr.bf16.mxu0 0
    %708 = vmatpush1.bf16.xpose.msra.mxu0 0
    %709 = vmatprep.subr.bf16.mxu0 0
    %710 = vmatpush1.bf16.xpose.msra.mxu0 0
    %711 = vmatprep.subr.bf16.mxu0 0
    %712 = vmatpush1.bf16.xpose.msra.mxu0 0
    %713 = vmatprep.subr.bf16.mxu0 0
    %714 = vmatpush1.bf16.xpose.msra.mxu0 0
    %715 = vmatprep.subr.bf16.mxu0 0
    %716 = vmatpush1.bf16.xpose.msra.mxu0 0
    %717 = vmatprep.subr.bf16.mxu0 0
    %718 = vmatpush1.bf16.xpose.msra.mxu0 0
    %719 = vmatprep.subr.bf16.mxu0 0
    %720 = vmatpush1.bf16.xpose.msra.mxu0 0
    %721 = vmatprep.subr.bf16.mxu0 0
    %722 = vmatpush1.bf16.xpose.msra.mxu0 0
    %723 = vmatprep.subr.bf16.mxu0 0
    %724 = vmatpush1.bf16.xpose.msra.mxu0 0
    %725 = vmatprep.subr.bf16.mxu0 0
    %726 = vmatpush1.bf16.xpose.msra.mxu0 0
    %727 = vmatprep.subr.bf16.mxu0 0
    %728 = vmatpush1.bf16.xpose.msra.mxu0 0
    %729 = vmatprep.subr.bf16.mxu0 0
    %730 = vmatpush1.bf16.xpose.msra.mxu0 0
    %731 = vmatprep.subr.bf16.mxu0 0
    %732 = vmatpush1.bf16.xpose.msra.mxu0 0
    %733 = vmatprep.mubr.bf16.mxu0 0
    %734 = vmatmul.mubr.bf16.gmra.mrb[0].mxu0 %v696
    %v735 = vpop.f32.mrb[0].mxu0
    %v736 = vadd.f32 0.0, %v735
    %v737 = vpop.f32.mrb[0].mxu0
    %v738 = vpop.f32.mrb[0].mxu0
    %v739 = vpop.f32.mrb[0].mxu0
    %740 = vdwg.mxu0
    %v741 = vsel %vm123, %v736, -inf
    %742 = vmax.xlane.f32.xlu0 %v741
    %v743 = vpop.xlane.xlu0 %742
    %v744 = vsub.f32 %v736, %v743
    %v745 = vmul.f32 %v744, 1.442695
    %v746 = vpow.pop %v745
    %v747 = vsel %vm123, %v746, 0.0
    %748 = vadd.xlane.f32.xlu0 %v747
    %v749 = vpop.xlane.xlu0 %748
    %v750 = vpack.c.bf16 %v746, %v746
    %751 = vrot.lane.b32.xlu0 %v580, 56
    %v752 = vpop.permute.xlu0 %751
    %v754 = vsel %vm123, %v750, 0
    %v757 = vsel %vm185, %v752, 0
    %759 = vmatprep.subr.bf16.mxu0 0
    %760 = vmatpush1.bf16.msra.mxu0 %v757
    %761 = vmatprep.subr.bf16.mxu0 0
    %762 = vmatpush1.bf16.msra.mxu0 0
    %763 = vmatprep.subr.bf16.mxu0 0
    %764 = vmatpush1.bf16.msra.mxu0 0
    %765 = vmatprep.subr.bf16.mxu0 0
    %766 = vmatpush1.bf16.msra.mxu0 0
    %767 = vmatprep.subr.bf16.mxu0 0
    %768 = vmatpush1.bf16.msra.mxu0 0
    %769 = vmatprep.subr.bf16.mxu0 0
    %770 = vmatpush1.bf16.msra.mxu0 0
    %771 = vmatprep.subr.bf16.mxu0 0
    %772 = vmatpush1.bf16.msra.mxu0 0
    %773 = vmatprep.subr.bf16.mxu0 0
    %774 = vmatpush1.bf16.msra.mxu0 0
    %775 = vmatprep.subr.bf16.mxu0 0
    %776 = vmatpush1.bf16.msra.mxu0 0
    %777 = vmatprep.subr.bf16.mxu0 0
    %778 = vmatpush1.bf16.msra.mxu0 0
    %779 = vmatprep.subr.bf16.mxu0 0
    %780 = vmatpush1.bf16.msra.mxu0 0
    %781 = vmatprep.subr.bf16.mxu0 0
    %782 = vmatpush1.bf16.msra.mxu0 0
    %783 = vmatprep.subr.bf16.mxu0 0
    %784 = vmatpush1.bf16.msra.mxu0 0
    %785 = vmatprep.subr.bf16.mxu0 0
    %786 = vmatpush1.bf16.msra.mxu0 0
    %787 = vmatprep.subr.bf16.mxu0 0
    %788 = vmatpush1.bf16.msra.mxu0 0
    %789 = vmatprep.subr.bf16.mxu0 0
    %790 = vmatpush1.bf16.msra.mxu0 0
    %791 = vmatprep.mubr.bf16.mxu0 0
    %792 = vmatmul.mubr.bf16.gmra.mrb[0].mxu0 %v754
    %v793 = vpop.f32.mrb[0].mxu0
    %v794 = vadd.f32 0.0, %v793
    %v795 = vpop.f32.mrb[0].mxu0
    %v796 = vpop.f32.mrb[0].mxu0
    %v797 = vpop.f32.mrb[0].mxu0
    %798 = vdwg.mxu0
    %v799 = vrcp.pop %v749
    %v800 = vmul.f32 %v794, %v799
    %802 = vrot.lane.b32.xlu0 %v800, 8
    %v803 = vpop.permute.xlu0 %802
    %805 = vst.msk [vmem:[%s689] sm:$0xff] %vm346, %v803
    %806 = vrot.lane.b32.xlu0 %v580, 112
    %v807 = vpop.permute.xlu0 %806
    %808 = vrot.lane.b32.xlu0 %v580, 80
    %v809 = vpop.permute.xlu0 %808
    %v811 = vsel %vm123, %v807, 0
    %v814 = vsel %vm123, %v809, 0
    %816 = vmatprep.subr.bf16.mxu0 0
    %817 = vmatpush1.bf16.xpose.msra.mxu0 %v814
    %818 = vmatprep.subr.bf16.mxu0 0
    %819 = vmatpush1.bf16.xpose.msra.mxu0 0
    %820 = vmatprep.subr.bf16.mxu0 0
    %821 = vmatpush1.bf16.xpose.msra.mxu0 0
    %822 = vmatprep.subr.bf16.mxu0 0
    %823 = vmatpush1.bf16.xpose.msra.mxu0 0
    %824 = vmatprep.subr.bf16.mxu0 0
    %825 = vmatpush1.bf16.xpose.msra.mxu0 0
    %826 = vmatprep.subr.bf16.mxu0 0
    %827 = vmatpush1.bf16.xpose.msra.mxu0 0
    %828 = vmatprep.subr.bf16.mxu0 0
    %829 = vmatpush1.bf16.xpose.msra.mxu0 0
    %830 = vmatprep.subr.bf16.mxu0 0
    %831 = vmatpush1.bf16.xpose.msra.mxu0 0
    %832 = vmatprep.subr.bf16.mxu0 0
    %833 = vmatpush1.bf16.xpose.msra.mxu0 0
    %834 = vmatprep.subr.bf16.mxu0 0
    %835 = vmatpush1.bf16.xpose.msra.mxu0 0
    %836 = vmatprep.subr.bf16.mxu0 0
    %837 = vmatpush1.bf16.xpose.msra.mxu0 0
    %838 = vmatprep.subr.bf16.mxu0 0
    %839 = vmatpush1.bf16.xpose.msra.mxu0 0
    %840 = vmatprep.subr.bf16.mxu0 0
    %841 = vmatpush1.bf16.xpose.msra.mxu0 0
    %842 = vmatprep.subr.bf16.mxu0 0
    %843 = vmatpush1.bf16.xpose.msra.mxu0 0
    %844 = vmatprep.subr.bf16.mxu0 0
    %845 = vmatpush1.bf16.xpose.msra.mxu0 0
    %846 = vmatprep.subr.bf16.mxu0 0
    %847 = vmatpush1.bf16.xpose.msra.mxu0 0
    %848 = vmatprep.mubr.bf16.mxu0 0
    %849 = vmatmul.mubr.bf16.gmra.mrb[0].mxu0 %v811
    %v850 = vpop.f32.mrb[0].mxu0
    %v851 = vadd.f32 0.0, %v850
    %v852 = vpop.f32.mrb[0].mxu0
    %v853 = vpop.f32.mrb[0].mxu0
    %v854 = vpop.f32.mrb[0].mxu0
    %855 = vdwg.mxu0
    %v856 = vsel %vm123, %v851, -inf
    %857 = vmax.xlane.f32.xlu0 %v856
    %v858 = vpop.xlane.xlu0 %857
    %v859 = vsub.f32 %v851, %v858
    %v860 = vmul.f32 %v859, 1.442695
    %v861 = vpow.pop %v860
    %v862 = vsel %vm123, %v861, 0.0
    %863 = vadd.xlane.f32.xlu0 %v862
    %v864 = vpop.xlane.xlu0 %863
    %v865 = vpack.c.bf16 %v861, %v861
    %866 = vrot.lane.b32.xlu0 %v580, 48
    %v867 = vpop.permute.xlu0 %866
    %v869 = vsel %vm123, %v865, 0
    %v872 = vsel %vm185, %v867, 0
    %874 = vmatprep.subr.bf16.mxu0 0
    %875 = vmatpush1.bf16.msra.mxu0 %v872
    %876 = vmatprep.subr.bf16.mxu0 0
    %877 = vmatpush1.bf16.msra.mxu0 0
    %878 = vmatprep.subr.bf16.mxu0 0
    %879 = vmatpush1.bf16.msra.mxu0 0
    %880 = vmatprep.subr.bf16.mxu0 0
    %881 = vmatpush1.bf16.msra.mxu0 0
    %882 = vmatprep.subr.bf16.mxu0 0
    %883 = vmatpush1.bf16.msra.mxu0 0
    %884 = vmatprep.subr.bf16.mxu0 0
    %885 = vmatpush1.bf16.msra.mxu0 0
    %886 = vmatprep.subr.bf16.mxu0 0
    %887 = vmatpush1.bf16.msra.mxu0 0
    %888 = vmatprep.subr.bf16.mxu0 0
    %889 = vmatpush1.bf16.msra.mxu0 0
    %890 = vmatprep.subr.bf16.mxu0 0
    %891 = vmatpush1.bf16.msra.mxu0 0
    %892 = vmatprep.subr.bf16.mxu0 0
    %893 = vmatpush1.bf16.msra.mxu0 0
    %894 = vmatprep.subr.bf16.mxu0 0
    %895 = vmatpush1.bf16.msra.mxu0 0
    %896 = vmatprep.subr.bf16.mxu0 0
    %897 = vmatpush1.bf16.msra.mxu0 0
    %898 = vmatprep.subr.bf16.mxu0 0
    %899 = vmatpush1.bf16.msra.mxu0 0
    %900 = vmatprep.subr.bf16.mxu0 0
    %901 = vmatpush1.bf16.msra.mxu0 0
    %902 = vmatprep.subr.bf16.mxu0 0
    %903 = vmatpush1.bf16.msra.mxu0 0
    %904 = vmatprep.subr.bf16.mxu0 0
    %905 = vmatpush1.bf16.msra.mxu0 0
    %906 = vmatprep.mubr.bf16.mxu0 0
    %907 = vmatmul.mubr.bf16.gmra.mrb[0].mxu0 %v869
    %v908 = vpop.f32.mrb[0].mxu0
    %v909 = vadd.f32 0.0, %v908
    %v910 = vpop.f32.mrb[0].mxu0
    %v911 = vpop.f32.mrb[0].mxu0
    %v912 = vpop.f32.mrb[0].mxu0
    %913 = vdwg.mxu0
    %v914 = vrcp.pop %v864
    %v915 = vmul.f32 %v909, %v914
    %917 = vrot.lane.b32.xlu0 %v915, 16
    %v918 = vpop.permute.xlu0 %917
    %920 = vst.msk [vmem:[%s689] sm:$0xff] %vm462, %v918
    %921 = vrot.lane.b32.xlu0 %v580, 104
    %v922 = vpop.permute.xlu0 %921
    %923 = vrot.lane.b32.xlu0 %v580, 72
    %v924 = vpop.permute.xlu0 %923
    %v926 = vsel %vm123, %v922, 0
    %v929 = vsel %vm123, %v924, 0
    %931 = vmatprep.subr.bf16.mxu0 0
    %932 = vmatpush1.bf16.xpose.msra.mxu0 %v929
    %933 = vmatprep.subr.bf16.mxu0 0
    %934 = vmatpush1.bf16.xpose.msra.mxu0 0
    %935 = vmatprep.subr.bf16.mxu0 0
    %936 = vmatpush1.bf16.xpose.msra.mxu0 0
    %937 = vmatprep.subr.bf16.mxu0 0
    %938 = vmatpush1.bf16.xpose.msra.mxu0 0
    %939 = vmatprep.subr.bf16.mxu0 0
    %940 = vmatpush1.bf16.xpose.msra.mxu0 0
    %941 = vmatprep.subr.bf16.mxu0 0
    %942 = vmatpush1.bf16.xpose.msra.mxu0 0
    %943 = vmatprep.subr.bf16.mxu0 0
    %944 = vmatpush1.bf16.xpose.msra.mxu0 0
    %945 = vmatprep.subr.bf16.mxu0 0
    %946 = vmatpush1.bf16.xpose.msra.mxu0 0
    %947 = vmatprep.subr.bf16.mxu0 0
    %948 = vmatpush1.bf16.xpose.msra.mxu0 0
    %949 = vmatprep.subr.bf16.mxu0 0
    %950 = vmatpush1.bf16.xpose.msra.mxu0 0
    %951 = vmatprep.subr.bf16.mxu0 0
    %952 = vmatpush1.bf16.xpose.msra.mxu0 0
    %953 = vmatprep.subr.bf16.mxu0 0
    %954 = vmatpush1.bf16.xpose.msra.mxu0 0
    %955 = vmatprep.subr.bf16.mxu0 0
    %956 = vmatpush1.bf16.xpose.msra.mxu0 0
    %957 = vmatprep.subr.bf16.mxu0 0
    %958 = vmatpush1.bf16.xpose.msra.mxu0 0
    %959 = vmatprep.subr.bf16.mxu0 0
    %960 = vmatpush1.bf16.xpose.msra.mxu0 0
    %961 = vmatprep.subr.bf16.mxu0 0
    %962 = vmatpush1.bf16.xpose.msra.mxu0 0
    %963 = vmatprep.mubr.bf16.mxu0 0
    %964 = vmatmul.mubr.bf16.gmra.mrb[0].mxu0 %v926
    %v965 = vpop.f32.mrb[0].mxu0
    %v966 = vadd.f32 0.0, %v965
    %v967 = vpop.f32.mrb[0].mxu0
    %v968 = vpop.f32.mrb[0].mxu0
    %v969 = vpop.f32.mrb[0].mxu0
    %970 = vdwg.mxu0
    %v971 = vsel %vm123, %v966, -inf
    %972 = vmax.xlane.f32.xlu0 %v971
    %v973 = vpop.xlane.xlu0 %972
    %v974 = vsub.f32 %v966, %v973
    %v975 = vmul.f32 %v974, 1.442695
    %v976 = vpow.pop %v975
    %v977 = vsel %vm123, %v976, 0.0
    %978 = vadd.xlane.f32.xlu0 %v977
    %v979 = vpop.xlane.xlu0 %978
    %v980 = vpack.c.bf16 %v976, %v976
    %981 = vrot.lane.b32.xlu0 %v580, 40
    %v982 = vpop.permute.xlu0 %981
    %v984 = vsel %vm123, %v980, 0
    %v987 = vsel %vm185, %v982, 0
    %989 = vmatprep.subr.bf16.mxu0 0
    %990 = vmatpush1.bf16.msra.mxu0 %v987
    %991 = vmatprep.subr.bf16.mxu0 0
    %992 = vmatpush1.bf16.msra.mxu0 0
    %993 = vmatprep.subr.bf16.mxu0 0
    %994 = vmatpush1.bf16.msra.mxu0 0
    %995 = vmatprep.subr.bf16.mxu0 0
    %996 = vmatpush1.bf16.msra.mxu0 0
    %997 = vmatprep.subr.bf16.mxu0 0
    %998 = vmatpush1.bf16.msra.mxu0 0
    %999 = vmatprep.subr.bf16.mxu0 0
    %1000 = vmatpush1.bf16.msra.mxu0 0
    %1001 = vmatprep.subr.bf16.mxu0 0
    %1002 = vmatpush1.bf16.msra.mxu0 0
    %1003 = vmatprep.subr.bf16.mxu0 0
    %1004 = vmatpush1.bf16.msra.mxu0 0
    %1005 = vmatprep.subr.bf16.mxu0 0
    %1006 = vmatpush1.bf16.msra.mxu0 0
    %1007 = vmatprep.subr.bf16.mxu0 0
    %1008 = vmatpush1.bf16.msra.mxu0 0
    %1009 = vmatprep.subr.bf16.mxu0 0
    %1010 = vmatpush1.bf16.msra.mxu0 0
    %1011 = vmatprep.subr.bf16.mxu0 0
    %1012 = vmatpush1.bf16.msra.mxu0 0
    %1013 = vmatprep.subr.bf16.mxu0 0
    %1014 = vmatpush1.bf16.msra.mxu0 0
    %1015 = vmatprep.subr.bf16.mxu0 0
    %1016 = vmatpush1.bf16.msra.mxu0 0
    %1017 = vmatprep.subr.bf16.mxu0 0
    %1018 = vmatpush1.bf16.msra.mxu0 0
    %1019 = vmatprep.subr.bf16.mxu0 0
    %1020 = vmatpush1.bf16.msra.mxu0 0
    %1021 = vmatprep.mubr.bf16.mxu0 0
    %1022 = vmatmul.mubr.bf16.gmra.mrb[0].mxu0 %v984
    %v1023 = vpop.f32.mrb[0].mxu0
    %v1024 = vadd.f32 0.0, %v1023
    %v1025 = vpop.f32.mrb[0].mxu0
    %v1026 = vpop.f32.mrb[0].mxu0
    %v1027 = vpop.f32.mrb[0].mxu0
    %1028 = vdwg.mxu0
    %v1029 = vrcp.pop %v979
    %v1030 = vmul.f32 %v1024, %v1029
    %1032 = vrot.lane.b32.xlu0 %v1030, 24
    %v1033 = vpop.permute.xlu0 %1032
    %1035 = vst.msk [vmem:[%s689] sm:$0xff] %vm578, %v1033
    // Predicated region
    $region22: #{tpu_custom_call.1} parent=1 // pred_check
      _
    $region23: #{tpu_custom_call.1} parent=1 // pred_check_branch
      %1037 = sbr.rel (0) target = $region25
    $region24: #{tpu_custom_call.1} parent=1 // pred_region
      %s1039 = ssub.s32 256, 256
      %1040 = vsyncadd [#allocation4], %s1039
      %s1041 = sshll.u32 [#allocation7], 4
      %s1042 = int_to_ptr.vmem [resolvable:$true] %s1041
      %1047 = dma.vmem_to_hbm [thread:$0]  %s1042, 256, %s3, [#allocation4], 128, 128, 8
    $region25: #{tpu_custom_call.1} parent=1 // pred_fallthru
      _
    // Predicated region
    $region26: #{tpu_custom_call.1} parent=1 // pred_check
      _
    $region27: #{tpu_custom_call.1} parent=1 // pred_check_branch
      %1049 = sbr.rel (0) target = $region29
    $region28: #{tpu_custom_call.1} parent=1 // pred_region
      %1050 = dma.done [#allocation4], 256
    $region29: #{tpu_custom_call.1} parent=1 // pred_fallthru
      _
    %1051 = vsyncpa [#allocation3], 1
    %1052 = vsyncpa [#allocation6], 1
    %1053 = vsyncpa [#allocation4], 1

</llo_original>
